<compile_context>
chip_gen: v5e
topology: v5e:2x2
jax: 0.10.0
libtpu: 0.0.40
codegen_flags: <defaults>
</compile_context>

<pallas_src>
import functools
import numpy as np
import jax
import jax.numpy as jnp
from jax.experimental import pallas as pl
from jax.experimental.pallas import tpu as pltpu


def _round_up(x, m):
    return (x + m - 1) // m * m


def projector_kernel(xcat_ref, wcat_ref, b01_ref, w1_ref, w2_ref, o_ref, *, h0):
    # Layer 0: conv is pre-folded into wcat, concat pre-done in the wrapper.
    h = (jnp.dot(xcat_ref[...], wcat_ref[...], preferred_element_type=jnp.float32)
         + b01_ref[:, :h0])
    h = jnp.maximum(h, 0.0)                                        # ReLU
    # Layer 1
    h = jnp.dot(h, w1_ref[...], preferred_element_type=jnp.float32) + b01_ref[:, h0:]
    h = jnp.maximum(h, 0.0)                                        # ReLU
    # Output layer (bias-free), lane-padded to a multiple of 128.
    o_ref[...] = jnp.dot(h, w2_ref[...],
                         preferred_element_type=jnp.float32).astype(o_ref.dtype)


def prepare_projector_params(wconv, w0, b0, w1, b1, w2):
    """One-time, jittable (pure jnp) parameter preprocessing.

    Folds the circular Conv1d into the first Linear:
        conv[b, e] = sum_{s,k} wconv[s, k] * x[b, s, (e - pad + k) % E]
    and packs the small parameters to minimize per-call DMA count.
    """
    S, K = wconv.shape
    two_e, H0 = w0.shape
    E = two_e // 2
    pad = (K - 1) // 2
    dtype = w0.dtype

    eye = jnp.eye(E, dtype=dtype)
    # basis[k, src, e] == 1  iff  src == (e - pad + k) % E
    basis = jnp.stack([jnp.roll(eye, k - pad, axis=0) for k in range(K)], axis=0)
    M = jnp.einsum('sk,kxe->sxe', wconv.astype(dtype), basis)          # (S, E, E)

    w0a, w0b = w0[:E, :], w0[E:, :]
    wc0 = jnp.einsum('sxe,eh->sxh', M, w0a).reshape(S * E, H0)         # conv folded into W0
    wcat = jnp.concatenate([wc0, w0b], axis=0)                         # ((S+1)*E, H0)

    b01 = jnp.concatenate([b0, b1]).reshape(1, -1)                     # packed biases

    H1, O = w2.shape
    o_pad = _round_up(O, 128)                                          # lane-dense stores
    w2p = jnp.pad(w2, ((0, 0), (0, o_pad - O)))

    meta = dict(enc_in=E, seq_len=S, h0=H0, h1=H1, out_dim=O, out_pad=o_pad)
    return (wcat, b01, w1, w2p), meta


def projector_forward(x, stats, wcat, b01, w1, w2p, *, h0, out_dim):
    B, S, E = x.shape
    F = wcat.shape[0]            # (S + 1) * E
    H1 = w1.shape[1]
    o_pad = w2p.shape[1]

    # Glue: flatten + concat so layer 0 is a single resident-weight matmul.
    xcat = jnp.concatenate([x.reshape(B, S * E), stats.reshape(B, E)], axis=1)

    # Row tiling: fill the MXU M dimension; "parallel" batch axis shards the
    # grid across TensorCores when B is large.
    TB = 256 if B >= 256 else _round_up(B, 8)
    Bp = _round_up(B, TB)
    if Bp != B:
        xcat = jnp.pad(xcat, ((0, Bp - B), (0, 0)))
    nb = Bp // TB

    flops = 2 * Bp * (F * h0 + h0 * H1 + H1 * o_pad)
    bytes_accessed = 4 * (Bp * F + wcat.size + b01.size + w1.size + w2p.size
                          + Bp * o_pad)

    out = pl.pallas_call(
        functools.partial(projector_kernel, h0=h0),
        out_shape=jax.ShapeDtypeStruct((Bp, o_pad), jnp.float32),
        grid=(nb,),
        in_specs=[
            pl.BlockSpec((TB, F), lambda i: (i, 0)),        # activations, row-tiled
            pl.BlockSpec((F, h0), lambda i: (0, 0)),        # fused conv+W0 (resident)
            pl.BlockSpec((1, h0 + H1), lambda i: (0, 0)),   # packed [b0 | b1]
            pl.BlockSpec((h0, H1), lambda i: (0, 0)),       # W1
            pl.BlockSpec((H1, o_pad), lambda i: (0, 0)),    # W2 (lane-padded)
        ],
        out_specs=pl.BlockSpec((TB, o_pad), lambda i: (i, 0)),
        compiler_params=pltpu.CompilerParams(
            dimension_semantics=("parallel",)),
        cost_estimate=pl.CostEstimate(
            flops=flops, transcendentals=0, bytes_accessed=bytes_accessed),
    )(xcat, wcat, b01, w1, w2p)

    return out[:B, :out_dim]


def projector_reference(x, stats, wconv, w0, b0, w1, b1, w2):
    """Pure-JAX reference mirroring the PyTorch forward pass."""
    B, S, E = x.shape
    K = wconv.shape[1]
    # circular padding by 1 on each side along enc_in
    xpad = jnp.concatenate([x[:, :, -1:], x, x[:, :, :1]], axis=2)
    conv = sum(jnp.einsum('bse,s->be', xpad[:, :, k:k + E], wconv[:, k])
               for k in range(K))
    z = jnp.concatenate([conv, stats[:, 0, :]], axis=1)
    h = jax.nn.relu(z @ w0 + b0)
    h = jax.nn.relu(h @ w1 + b1)
    return h @ w2


if __name__ == "__main__":
    # Small shapes consistent with the module:
    # enc_in=8, seq_len=16, hidden_dims=[32, 32], hidden_layers=2, output_dim=4
    B, S, E = 4, 16, 8
    H0, H1, O = 32, 32, 4

    key = jax.random.PRNGKey(0)
    ks = jax.random.split(key, 8)
    x     = jax.random.normal(ks[0], (B, S, E), jnp.float32)
    stats = jax.random.normal(ks[1], (B, 1, E), jnp.float32)
    # deterministic synthetic parameters (shapes from __init__)
    wconv = jax.random.normal(ks[2], (S, 3), jnp.float32) * 0.2       # Conv1d(seq_len->1, k=3)
    w0    = jax.random.normal(ks[3], (2 * E, H0), jnp.float32) * 0.1  # Linear(2*enc_in, H0)
    b0    = jax.random.normal(ks[4], (H0,), jnp.float32) * 0.1
    w1    = jax.random.normal(ks[5], (H0, H1), jnp.float32) * 0.1     # Linear(H0, H1)
    b1    = jax.random.normal(ks[6], (H1,), jnp.float32) * 0.1
    w2    = jax.random.normal(ks[7], (H1, O), jnp.float32) * 0.1      # Linear(H1, O, bias=False)

    # One-time parameter preprocessing (hoisted out of the per-call path).
    (wcat, b01, w1p, w2p), meta = prepare_projector_params(wconv, w0, b0, w1, b1, w2)

    fwd = jax.jit(projector_forward, static_argnames=("h0", "out_dim"))
    y = fwd(x, stats, wcat, b01, w1p, w2p, h0=meta["h0"], out_dim=meta["out_dim"])
    y = jax.block_until_ready(y)

    y_ref = projector_reference(x, stats, wconv, w0, b0, w1, b1, w2)
    np.testing.assert_allclose(np.asarray(y), np.asarray(y_ref), rtol=1e-4, atol=1e-4)
    print("KERNEL_OK")
</pallas_src>

<mosaic_0001>
module attributes {stable_mosaic.version = 11 : i64} {
  func.func @projector_kernel(%arg0: i32, %arg1: memref<8x136xf32, #tpu.memory_space<vmem>>, %arg2: memref<136x32xf32, #tpu.memory_space<vmem>>, %arg3: memref<1x64xf32, #tpu.memory_space<vmem>>, %arg4: memref<32x32xf32, #tpu.memory_space<vmem>>, %arg5: memref<32x128xf32, #tpu.memory_space<vmem>>, %arg6: memref<8x128xf32, #tpu.memory_space<vmem>>) attributes {dimension_semantics = [#tpu.dimension_semantics<parallel>], iteration_bounds = array<i64: 1>, scalar_prefetch = 0 : i64, scratch_operands = 0 : i64, tpu.core_type = #tpu.core_type<tc>, window_params = [{transform_indices = @transform_0, window_bounds = array<i64: 8, 136>}, {pipeline_mode = #tpu.pipeline_mode<synchronous>, transform_indices = @transform_1, window_bounds = array<i64: 136, 32>}, {pipeline_mode = #tpu.pipeline_mode<synchronous>, transform_indices = @transform_2, window_bounds = array<i64: 1, 64>}, {pipeline_mode = #tpu.pipeline_mode<synchronous>, transform_indices = @transform_3, window_bounds = array<i64: 32, 32>}, {pipeline_mode = #tpu.pipeline_mode<synchronous>, transform_indices = @transform_4, window_bounds = array<i64: 32, 128>}, {transform_indices = @transform_5, window_bounds = array<i64: 8, 128>}]} {
    %c0 = arith.constant 0 : index
    %c0_0 = arith.constant 0 : index
    %0 = vector.load %arg1[%c0, %c0_0] : memref<8x136xf32, #tpu.memory_space<vmem>>, vector<8x136xf32>
    %c0_1 = arith.constant 0 : index
    %c0_2 = arith.constant 0 : index
    %1 = vector.load %arg2[%c0_1, %c0_2] : memref<136x32xf32, #tpu.memory_space<vmem>>, vector<136x32xf32>
    %cst = arith.constant dense<0.000000e+00> : vector<8x32xf32>
    %2 = tpu.matmul %0, %1, %cst {dimension_numbers = #tpu.dot_dimension_numbers<[1], [0], [0], [1], [0, 0, 1, 1], [], []>} : vector<8x136xf32>, vector<136x32xf32>, vector<8x32xf32> -> vector<8x32xf32>
    %c0_3 = arith.constant 0 : index
    %c0_4 = arith.constant 0 : index
    %3 = vector.load %arg3[%c0_3, %c0_4] : memref<1x64xf32, #tpu.memory_space<vmem>>, vector<1x32xf32>
    %4 = vector.broadcast %3 : vector<1x32xf32> to vector<8x32xf32>
    %5 = arith.addf %2, %4 : vector<8x32xf32>
    %cst_5 = arith.constant 0.000000e+00 : f32
    %6 = vector.broadcast %cst_5 : f32 to vector<8x32xf32>
    %7 = arith.maximumf %5, %6 : vector<8x32xf32>
    %c0_6 = arith.constant 0 : index
    %c0_7 = arith.constant 0 : index
    %8 = vector.load %arg4[%c0_6, %c0_7] : memref<32x32xf32, #tpu.memory_space<vmem>>, vector<32x32xf32>
    %cst_8 = arith.constant dense<0.000000e+00> : vector<8x32xf32>
    %9 = tpu.matmul %7, %8, %cst_8 {dimension_numbers = #tpu.dot_dimension_numbers<[1], [0], [0], [1], [0, 0, 1, 1], [], []>} : vector<8x32xf32>, vector<32x32xf32>, vector<8x32xf32> -> vector<8x32xf32>
    %c0_9 = arith.constant 0 : index
    %c32 = arith.constant 32 : index
    %10 = vector.load %arg3[%c0_9, %c32] : memref<1x64xf32, #tpu.memory_space<vmem>>, vector<1x32xf32>
    %11 = vector.broadcast %10 : vector<1x32xf32> to vector<8x32xf32>
    %12 = arith.addf %9, %11 : vector<8x32xf32>
    %cst_10 = arith.constant 0.000000e+00 : f32
    %13 = vector.broadcast %cst_10 : f32 to vector<8x32xf32>
    %14 = arith.maximumf %12, %13 : vector<8x32xf32>
    %c0_11 = arith.constant 0 : index
    %c0_12 = arith.constant 0 : index
    %15 = vector.load %arg5[%c0_11, %c0_12] : memref<32x128xf32, #tpu.memory_space<vmem>>, vector<32x128xf32>
    %cst_13 = arith.constant dense<0.000000e+00> : vector<8x128xf32>
    %16 = tpu.matmul %14, %15, %cst_13 {dimension_numbers = #tpu.dot_dimension_numbers<[1], [0], [0], [1], [0, 0, 1, 1], [], []>} : vector<8x32xf32>, vector<32x128xf32>, vector<8x128xf32> -> vector<8x128xf32>
    %c0_14 = arith.constant 0 : index
    %c0_15 = arith.constant 0 : index
    %17 = vector.load %arg6[%c0_14, %c0_15] : memref<8x128xf32, #tpu.memory_space<vmem>>, vector<8x128xf32>
    tpu.vector_store %arg6[%c0_14, %c0_15], %16 {strides = array<i32>} : memref<8x128xf32, #tpu.memory_space<vmem>>, vector<8x128xf32>,
    return
  }
  func.func @transform_0(%arg0: i32) -> (i32, i32) {
    %c0_i32 = arith.constant 0 : i32
    %c0_i32_0 = arith.constant 0 : i32
    return %arg0, %c0_i32 : i32, i32
  }
  func.func @transform_1(%arg0: i32) -> (i32, i32) {
    %c0_i32 = arith.constant 0 : i32
    %c0_i32_0 = arith.constant 0 : i32
    %c0_i32_1 = arith.constant 0 : i32
    return %c0_i32, %c0_i32_0 : i32, i32
  }
  func.func @transform_2(%arg0: i32) -> (i32, i32) {
    %c0_i32 = arith.constant 0 : i32
    %c0_i32_0 = arith.constant 0 : i32
    %c0_i32_1 = arith.constant 0 : i32
    return %c0_i32, %c0_i32_0 : i32, i32
  }
  func.func @transform_3(%arg0: i32) -> (i32, i32) {
    %c0_i32 = arith.constant 0 : i32
    %c0_i32_0 = arith.constant 0 : i32
    %c0_i32_1 = arith.constant 0 : i32
    return %c0_i32, %c0_i32_0 : i32, i32
  }
  func.func @transform_4(%arg0: i32) -> (i32, i32) {
    %c0_i32 = arith.constant 0 : i32
    %c0_i32_0 = arith.constant 0 : i32
    %c0_i32_1 = arith.constant 0 : i32
    return %c0_i32, %c0_i32_0 : i32, i32
  }
  func.func @transform_5(%arg0: i32) -> (i32, i32) {
    %c0_i32 = arith.constant 0 : i32
    %c0_i32_0 = arith.constant 0 : i32
    return %arg0, %c0_i32 : i32, i32
  }
}

</mosaic_0001>

<llo_original>
// kernel: projector_forward.1
$region0: #{projector_forward.1}
  #allocation0 [shape = 'u32[]', space=smem, size = 0x4, offset = 0x4, fixed_abs, tag = 'smem constant byte address 0x4 - core index']
  #allocation1 [shape = 'u32[72,128]{1,0:T(1,128)}', space=vmem, size = 0x9000, scoped, tag = 'internal scratch']
  %s0 = inlined_call_operand.vmem [shape: f32[8,136], index: 0, kind: input, shape index: {}]
  %s1 = inlined_call_operand.vmem [shape: f32[136,32], index: 1, kind: input, shape index: {}]
  %s2 = inlined_call_operand.vmem [shape: f32[1,64], index: 2, kind: input, shape index: {}]
  %s3 = inlined_call_operand.vmem [shape: f32[32,32], index: 3, kind: input, shape index: {}]
  %s4 = inlined_call_operand.vmem [shape: f32[32,128], index: 4, kind: input, shape index: {}]
  %s5 = inlined_call_operand.vmem [shape: f32[8,128], index: 5, kind: output, shape index: {}]
  %s6 = sld [smem:[#allocation0]]
  $region30: #{projector_forward.1} parent=0
    _
  %s8 = ssub.s32 1, %s6
  %s9 = scalar_select 0, %s8, %s6
  // Predicated region
  $region2: #{projector_forward.1} parent=0 // pred_check
    _
  $region3: #{projector_forward.1} parent=0 // pred_check_branch
    %11 = sbr.rel (0) target = $region5
  $region4: #{projector_forward.1} parent=0 // pred_region
    _
  $region5: #{projector_forward.1} parent=0 // pred_fallthru
    _
  // Predicated region
  $region6: #{projector_forward.1} parent=0 // pred_check
    _
  $region7: #{projector_forward.1} parent=0 // pred_check_branch
    %13 = sbr.rel (0) target = $region9
  $region8: #{projector_forward.1} parent=0 // pred_region
    _
  $region9: #{projector_forward.1} parent=0 // pred_fallthru
    _
  // Predicated region
  $region10: #{projector_forward.1} parent=0 // pred_check
    _
  $region11: #{projector_forward.1} parent=0 // pred_check_branch
    %15 = sbr.rel (0) target = $region13
  $region12: #{projector_forward.1} parent=0 // pred_region
    _
  $region13: #{projector_forward.1} parent=0 // pred_fallthru
    _
  // Predicated region
  $region14: #{projector_forward.1} parent=0 // pred_check
    _
  $region15: #{projector_forward.1} parent=0 // pred_check_branch
    %17 = sbr.rel (0) target = $region17
  $region16: #{projector_forward.1} parent=0 // pred_region
    _
  $region17: #{projector_forward.1} parent=0 // pred_fallthru
    _
  // Predicated region
  $region18: #{projector_forward.1} parent=0 // pred_check
    _
  $region19: #{projector_forward.1} parent=0 // pred_check_branch
    %19 = sbr.rel (0) target = $region21
  $region20: #{projector_forward.1} parent=0 // pred_region
    _
  $region21: #{projector_forward.1} parent=0 // pred_fallthru
    _
  %v20 = vld [vmem:[%s0] sm:$0xff]
  %v21 = vld [vmem:[%s0 + $0x8] sm:$0xff]
  %v22 = vld [vmem:[%s1] sm:$0xff]
  %v23 = vld [vmem:[%s1 + $0x8] sm:$0xff]
  %v24 = vld [vmem:[%s1 + $0x10] sm:$0xff]
  %v25 = vld [vmem:[%s1 + $0x18] sm:$0xff]
  %v26 = vld [vmem:[%s1 + $0x20] sm:$0xff]
  %v27 = vld [vmem:[%s1 + $0x28] sm:$0xff]
  %v28 = vld [vmem:[%s1 + $0x30] sm:$0xff]
  %v29 = vld [vmem:[%s1 + $0x38] sm:$0xff]
  %v30 = vld [vmem:[%s1 + $0x40] sm:$0xff]
  %v31 = vld [vmem:[%s1 + $0x48] sm:$0xff]
  %v32 = vld [vmem:[%s1 + $0x50] sm:$0xff]
  %v33 = vld [vmem:[%s1 + $0x58] sm:$0xff]
  %v34 = vld [vmem:[%s1 + $0x60] sm:$0xff]
  %v35 = vld [vmem:[%s1 + $0x68] sm:$0xff]
  %v36 = vld [vmem:[%s1 + $0x70] sm:$0xff]
  %v37 = vld [vmem:[%s1 + $0x78] sm:$0xff]
  %v38 = vld [vmem:[%s1 + $0x80] sm:$0xff]
  %v39 = vld [vmem:[%s2] sm:$0x1]
  %v41 = vperm.slane %v39, 0
  %vm43 = vcmask 64512
  %v45 = vsel %vm43, %v21, 0
  %47 = vmatpush.msra.mxu0 %v37
  %48 = vmatpush.msra.mxu0 %v36
  %49 = vmatpush.msra.mxu0 %v35
  %50 = vmatpush.msra.mxu0 %v34
  %51 = vmatpush.msra.mxu0 %v33
  %52 = vmatpush.msra.mxu0 %v32
  %53 = vmatpush.msra.mxu0 %v31
  %54 = vmatpush.msra.mxu0 %v30
  %55 = vmatpush.msra.mxu0 %v29
  %56 = vmatpush.msra.mxu0 %v28
  %57 = vmatpush.msra.mxu0 %v27
  %58 = vmatpush.msra.mxu0 %v26
  %59 = vmatpush.msra.mxu0 %v25
  %60 = vmatpush.msra.mxu0 %v24
  %61 = vmatpush.msra.mxu0 %v23
  %62 = vmatpush.msra.mxu0 %v22
  %63 = vmatmul.f32.gmra.mxu0 %v20
  %v64 = vpop.f32.mrf.mxu0
  %v65 = vadd.f32 %v41, %v64
  %66 = vdwg.mxu0
  %67 = vmatpush.msra.mxu0 0.0
  %68 = vmatpush.msra.mxu0 0.0
  %69 = vmatpush.msra.mxu0 0.0
  %70 = vmatpush.msra.mxu0 0.0
  %71 = vmatpush.msra.mxu0 0.0
  %72 = vmatpush.msra.mxu0 0.0
  %73 = vmatpush.msra.mxu0 0.0
  %74 = vmatpush.msra.mxu0 0.0
  %75 = vmatpush.msra.mxu0 0.0
  %76 = vmatpush.msra.mxu0 0.0
  %77 = vmatpush.msra.mxu0 0.0
  %78 = vmatpush.msra.mxu0 0.0
  %79 = vmatpush.msra.mxu0 0.0
  %80 = vmatpush.msra.mxu0 0.0
  %81 = vmatpush.msra.mxu0 0.0
  %82 = vmatpush.msra.mxu0 %v38
  %83 = vmatmul.f32.gmra.mxu0 %v45
  %v84 = vpop.f32.mrf.mxu0
  %v85 = vadd.f32 %v65, %v84
  %86 = vdwg.mxu0
  %v87 = vmax.f32 %v85, 0.0
  %v88 = vld [vmem:[%s3] sm:$0xff]
  %v89 = vld [vmem:[%s3 + $0x8] sm:$0xff]
  %v90 = vld [vmem:[%s3 + $0x10] sm:$0xff]
  %v91 = vld [vmem:[%s3 + $0x18] sm:$0xff]
  %92 = vrot.lane.b32.xlu0 %v41, 96
  %v93 = vpop.permute.xlu0 %92
  %vm95 = vcmask 261120
  %v97 = vsel %vm95, %v87, 0
  %99 = vmatpush.msra.mxu0 0.0
  %100 = vmatpush.msra.mxu0 0.0
  %101 = vmatpush.msra.mxu0 0.0
  %102 = vmatpush.msra.mxu0 0.0
  %103 = vmatpush.msra.mxu0 0.0
  %104 = vmatpush.msra.mxu0 0.0
  %105 = vmatpush.msra.mxu0 0.0
  %106 = vmatpush.msra.mxu0 0.0
  %107 = vmatpush.msra.mxu0 0.0
  %108 = vmatpush.msra.mxu0 0.0
  %109 = vmatpush.msra.mxu0 0.0
  %110 = vmatpush.msra.mxu0 0.0
  %111 = vmatpush.msra.mxu0 %v91
  %112 = vmatpush.msra.mxu0 %v90
  %113 = vmatpush.msra.mxu0 %v89
  %114 = vmatpush.msra.mxu0 %v88
  %115 = vmatmul.f32.gmra.mxu0 %v97
  %v116 = vpop.f32.mrf.mxu0
  %v117 = vadd.f32 %v93, %v116
  %118 = vdwg.mxu0
  %v119 = vmax.f32 %v117, 0.0
  %v120 = vld [vmem:[%s4] sm:$0xff]
  %v121 = vld [vmem:[%s4 + $0x8] sm:$0xff]
  %v122 = vld [vmem:[%s4 + $0x10] sm:$0xff]
  %v123 = vld [vmem:[%s4 + $0x18] sm:$0xff]
  %v125 = vsel %vm95, %v119, 0
  %127 = vmatpush.msra.mxu0 0.0
  %128 = vmatpush.msra.mxu0 0.0
  %129 = vmatpush.msra.mxu0 0.0
  %130 = vmatpush.msra.mxu0 0.0
  %131 = vmatpush.msra.mxu0 0.0
  %132 = vmatpush.msra.mxu0 0.0
  %133 = vmatpush.msra.mxu0 0.0
  %134 = vmatpush.msra.mxu0 0.0
  %135 = vmatpush.msra.mxu0 0.0
  %136 = vmatpush.msra.mxu0 0.0
  %137 = vmatpush.msra.mxu0 0.0
  %138 = vmatpush.msra.mxu0 0.0
  %139 = vmatpush.msra.mxu0 %v123
  %140 = vmatpush.msra.mxu0 %v122
  %141 = vmatpush.msra.mxu0 %v121
  %142 = vmatpush.msra.mxu0 %v120
  %143 = vmatmul.f32.gmra.mxu0 %v125
  %v144 = vpop.f32.mrf.mxu0
  %v145 = vadd.f32 0.0, %v144
  %146 = vdwg.mxu0
  %147 = vst [vmem:[%s5] sm:$0xff] %v145
  // Predicated region
  $region22: #{projector_forward.1} parent=0 // pred_check
    _
  $region23: #{projector_forward.1} parent=0 // pred_check_branch
    %149 = sbr.rel (0) target = $region25
  $region24: #{projector_forward.1} parent=0 // pred_region
    _
  $region25: #{projector_forward.1} parent=0 // pred_fallthru
    _
  // Predicated region
  $region26: #{projector_forward.1} parent=0 // pred_check
    _
  $region27: #{projector_forward.1} parent=0 // pred_check_branch
    %151 = sbr.rel (0) target = $region29
  $region28: #{projector_forward.1} parent=0 // pred_region
    _
  $region29: #{projector_forward.1} parent=0 // pred_fallthru
    _

</llo_original>
